<compile_context>
chip_gen: v5e
topology: v5e:2x2
jax: 0.10.0
libtpu: 0.0.40
codegen_flags: <defaults>
</compile_context>

<pallas_src>
import functools

import jax
import jax.numpy as jnp
from jax.experimental import pallas as pl
from jax.experimental.pallas import tpu as pltpu


def _round_up(x, m):
    return ((x + m - 1) // m) * m


def _ffn_kernel(x_ref, w1_ref, b1_ref, w2_ref, b2_ref, o_ref, acc_ref):
    # x_ref:  (tm, dim)      w1_ref: (dim, tk)   b1_ref: (1, tk)   [f32]
    # w2_ref: (tk, dim)      b2_ref: (1, dim)    [f32]
    # o_ref:  (tm, dim)      acc_ref: (tm, dim)  [f32 VMEM scratch]
    k = pl.program_id(1)

    @pl.when(k == 0)
    def _():
        acc_ref[...] = jnp.zeros_like(acc_ref)

    # First matmul (MXU, f32 accumulate), bias + ReLU in f32.
    h = jnp.dot(x_ref[...], w1_ref[...], preferred_element_type=jnp.float32)
    h = jnp.maximum(h + b1_ref[...], 0.0)
    # Dropout(p=0.0) is the identity -> no-op.
    # Second matmul: cast only the dot operand, keep f32 accumulation.
    acc_ref[...] += jnp.dot(h.astype(w2_ref.dtype), w2_ref[...],
                            preferred_element_type=jnp.float32)

    @pl.when(k == pl.num_programs(1) - 1)
    def _():
        o_ref[...] = (acc_ref[...] + b2_ref[...]).astype(o_ref.dtype)


def relu_feedforward(x, w1, b1, w2, b2, *, tm=256, tk=512, compute_dtype=None):
    """x: [B, S, dim] -> [B, S, dim].

    w1: (dim, hidden), b1: (hidden,), w2: (hidden, dim), b2: (dim,)
    (weights stored as (in, out) so the kernel computes x @ W, matching
    torch's y = x @ W.T with W of shape (out, in)).
    """
    B, S, dim = x.shape
    hidden = w1.shape[1]
    assert dim % 128 == 0, "pad model dim to a multiple of 128 (lane-dense stores)"

    out_dtype = x.dtype
    cdt = compute_dtype if compute_dtype is not None else x.dtype

    # Hidden (reduction) tile: multiple of 128, or fall back to full residency.
    tk = min(tk, hidden)
    if hidden % tk != 0 or tk % 128 != 0:
        tk = hidden

    # Row tile: default 256 (MXU aligned); shrink for tiny inputs (mult of 8).
    M = B * S
    tm = min(tm, _round_up(M, 8))
    Mp = _round_up(M, tm)

    x2d = x.reshape(M, dim)
    if Mp != M:
        x2d = jnp.pad(x2d, ((0, Mp - M), (0, 0)))

    x2d = x2d.astype(cdt)
    w1c = w1.astype(cdt)
    w2c = w2.astype(cdt)
    b1_2d = b1.reshape(1, hidden).astype(jnp.float32)
    b2_2d = b2.reshape(1, dim).astype(jnp.float32)

    bytes_io = (
        Mp * dim * (x2d.dtype.itemsize + jnp.dtype(out_dtype).itemsize)
        + 2 * dim * hidden * w1c.dtype.itemsize
        + 4 * (hidden + dim)
    )
    cost = pl.CostEstimate(
        flops=4 * Mp * dim * hidden,  # two matmuls, 2*M*dim*hidden each
        transcendentals=0,
        bytes_accessed=int(bytes_io),
    )

    out2d = pl.pallas_call(
        _ffn_kernel,
        out_shape=jax.ShapeDtypeStruct((Mp, dim), out_dtype),
        grid_spec=pltpu.PrefetchScalarGridSpec(
            num_scalar_prefetch=0,
            grid=(Mp // tm, hidden // tk),
            in_specs=[
                pl.BlockSpec((tm, dim), lambda i, k: (i, 0)),   # x tile
                pl.BlockSpec((dim, tk), lambda i, k: (0, k)),   # W1 hidden-block
                pl.BlockSpec((1, tk), lambda i, k: (0, k)),     # b1 hidden-block
                pl.BlockSpec((tk, dim), lambda i, k: (k, 0)),   # W2 hidden-block
                pl.BlockSpec((1, dim), lambda i, k: (0, 0)),    # b2 (full)
            ],
            out_specs=pl.BlockSpec((tm, dim), lambda i, k: (i, 0)),
            scratch_shapes=[pltpu.VMEM((tm, dim), jnp.float32)],
        ),
        compiler_params=pltpu.CompilerParams(
            dimension_semantics=("parallel", "arbitrary"),
            vmem_limit_bytes=64 * 1024 * 1024,
        ),
        cost_estimate=cost,
    )(x2d, w1c, b1_2d, w2c, b2_2d)

    return out2d[:M].reshape(B, S, dim)


def _init_params(key, dim, hidden):
    # Deterministic synthetic init (uniform, like torch's default Linear init).
    k1, k2, k3, k4 = jax.random.split(key, 4)
    lim1 = 1.0 / jnp.sqrt(dim)
    lim2 = 1.0 / jnp.sqrt(hidden)
    w1 = jax.random.uniform(k1, (dim, hidden), jnp.float32, -lim1, lim1)
    b1 = jax.random.uniform(k2, (hidden,), jnp.float32, -lim1, lim1)
    w2 = jax.random.uniform(k3, (hidden, dim), jnp.float32, -lim2, lim2)
    b2 = jax.random.uniform(k4, (dim,), jnp.float32, -lim2, lim2)
    return w1, b1, w2, b2


if __name__ == "__main__":
    # Small shapes, but dim/hidden kept at multiples of 128 so the kernel runs
    # on real (unmasked) lane-dense layouts.
    B, S, dim, hidden = 2, 8, 128, 256
    key = jax.random.PRNGKey(0)
    kx, kp = jax.random.split(key)
    x = jax.random.normal(kx, (B, S, dim), jnp.float32)
    w1, b1, w2, b2 = _init_params(kp, dim, hidden)

    # Pure-JAX reference.
    ref = (jnp.maximum(x.reshape(-1, dim) @ w1 + b1, 0.0) @ w2 + b2).reshape(B, S, dim)

    # f32 compute path (exactness check).
    out_f32 = jax.block_until_ready(
        relu_feedforward(x, w1, b1, w2, b2, compute_dtype=jnp.float32))
    assert out_f32.shape == (B, S, dim)
    assert jnp.allclose(out_f32, ref, atol=2e-3, rtol=2e-3)

    # bf16-operand path (the perf-default for real shapes), loose tolerance.
    out_bf16 = jax.block_until_ready(
        relu_feedforward(x, w1, b1, w2, b2, compute_dtype=jnp.bfloat16))
    assert out_bf16.shape == (B, S, dim)
    assert jnp.allclose(out_bf16, ref, atol=1e-1, rtol=1e-1)

    print("KERNEL_OK")
</pallas_src>

<mosaic_0001>
module attributes {stable_mosaic.version = 11 : i64} {
  func.func @_ffn_kernel(%arg0: i32, %arg1: i32, %arg2: memref<16x128xf32, #tpu.memory_space<vmem>>, %arg3: memref<128x256xf32, #tpu.memory_space<vmem>>, %arg4: memref<1x256xf32, #tpu.memory_space<vmem>>, %arg5: memref<256x128xf32, #tpu.memory_space<vmem>>, %arg6: memref<1x128xf32, #tpu.memory_space<vmem>>, %arg7: memref<16x128xf32, #tpu.memory_space<vmem>>, %arg8: memref<16x128xf32, #tpu.memory_space<vmem>>) attributes {dimension_semantics = [#tpu.dimension_semantics<parallel>, #tpu.dimension_semantics<arbitrary>], iteration_bounds = array<i64: 1, 1>, scalar_prefetch = 0 : i64, scratch_operands = 1 : i64, tpu.core_type = #tpu.core_type<tc>, window_params = [{transform_indices = @transform_0, window_bounds = array<i64: 16, 128>}, {transform_indices = @transform_1, window_bounds = array<i64: 128, 256>}, {transform_indices = @transform_2, window_bounds = array<i64: 1, 256>}, {transform_indices = @transform_3, window_bounds = array<i64: 256, 128>}, {pipeline_mode = #tpu.pipeline_mode<synchronous>, transform_indices = @transform_4, window_bounds = array<i64: 1, 128>}, {transform_indices = @transform_5, window_bounds = array<i64: 16, 128>}]} {
    %c0_i32 = arith.constant 0 : i32
    %0 = arith.cmpi eq, %arg1, %c0_i32 : i32
    %1 = arith.extui %0 : i1 to i32
    %c0_i32_0 = arith.constant 0 : i32
    %2 = arith.cmpi ne, %1, %c0_i32_0 : i32
    scf.if %2 {
      %cst_16 = arith.constant 0.000000e+00 : f32
      %19 = vector.broadcast %cst_16 : f32 to vector<16x128xf32>
      %c0_17 = arith.constant 0 : index
      %c0_18 = arith.constant 0 : index
      %20 = vector.load %arg8[%c0_17, %c0_18] : memref<16x128xf32, #tpu.memory_space<vmem>>, vector<16x128xf32>
      tpu.vector_store %arg8[%c0_17, %c0_18], %19 {strides = array<i32>} : memref<16x128xf32, #tpu.memory_space<vmem>>, vector<16x128xf32>,
    } else {
    }
    %c0 = arith.constant 0 : index
    %c0_1 = arith.constant 0 : index
    %3 = vector.load %arg2[%c0, %c0_1] : memref<16x128xf32, #tpu.memory_space<vmem>>, vector<16x128xf32>
    %c0_2 = arith.constant 0 : index
    %c0_3 = arith.constant 0 : index
    %4 = vector.load %arg3[%c0_2, %c0_3] : memref<128x256xf32, #tpu.memory_space<vmem>>, vector<128x256xf32>
    %cst = arith.constant dense<0.000000e+00> : vector<16x256xf32>
    %5 = tpu.matmul %3, %4, %cst {dimension_numbers = #tpu.dot_dimension_numbers<[1], [0], [0], [1], [0, 0, 1, 1], [], []>} : vector<16x128xf32>, vector<128x256xf32>, vector<16x256xf32> -> vector<16x256xf32>
    %c0_4 = arith.constant 0 : index
    %c0_5 = arith.constant 0 : index
    %6 = vector.load %arg4[%c0_4, %c0_5] : memref<1x256xf32, #tpu.memory_space<vmem>>, vector<1x256xf32>
    %7 = vector.broadcast %6 : vector<1x256xf32> to vector<16x256xf32>
    %8 = arith.addf %5, %7 : vector<16x256xf32>
    %cst_6 = arith.constant 0.000000e+00 : f32
    %9 = vector.broadcast %cst_6 : f32 to vector<16x256xf32>
    %10 = arith.maximumf %8, %9 : vector<16x256xf32>
    %c0_7 = arith.constant 0 : index
    %c0_8 = arith.constant 0 : index
    %11 = vector.load %arg8[%c0_7, %c0_8] : memref<16x128xf32, #tpu.memory_space<vmem>>, vector<16x128xf32>
    %c0_9 = arith.constant 0 : index
    %c0_10 = arith.constant 0 : index
    %12 = vector.load %arg5[%c0_9, %c0_10] : memref<256x128xf32, #tpu.memory_space<vmem>>, vector<256x128xf32>
    %cst_11 = arith.constant dense<0.000000e+00> : vector<16x128xf32>
    %13 = tpu.matmul %10, %12, %cst_11 {dimension_numbers = #tpu.dot_dimension_numbers<[1], [0], [0], [1], [0, 0, 1, 1], [], []>} : vector<16x256xf32>, vector<256x128xf32>, vector<16x128xf32> -> vector<16x128xf32>
    %14 = arith.addf %11, %13 : vector<16x128xf32>
    %c0_12 = arith.constant 0 : index
    %c0_13 = arith.constant 0 : index
    %15 = vector.load %arg8[%c0_12, %c0_13] : memref<16x128xf32, #tpu.memory_space<vmem>>, vector<16x128xf32>
    tpu.vector_store %arg8[%c0_12, %c0_13], %14 {strides = array<i32>} : memref<16x128xf32, #tpu.memory_space<vmem>>, vector<16x128xf32>,
    %c0_i32_14 = arith.constant 0 : i32
    %16 = arith.cmpi eq, %arg1, %c0_i32_14 : i32
    %17 = arith.extui %16 : i1 to i32
    %c0_i32_15 = arith.constant 0 : i32
    %18 = arith.cmpi ne, %17, %c0_i32_15 : i32
    scf.if %18 {
      %c0_16 = arith.constant 0 : index
      %c0_17 = arith.constant 0 : index
      %19 = vector.load %arg8[%c0_16, %c0_17] : memref<16x128xf32, #tpu.memory_space<vmem>>, vector<16x128xf32>
      %c0_18 = arith.constant 0 : index
      %c0_19 = arith.constant 0 : index
      %20 = vector.load %arg6[%c0_18, %c0_19] : memref<1x128xf32, #tpu.memory_space<vmem>>, vector<1x128xf32>
      %21 = vector.broadcast %20 : vector<1x128xf32> to vector<16x128xf32>
      %22 = arith.addf %19, %21 : vector<16x128xf32>
      %c0_20 = arith.constant 0 : index
      %c0_21 = arith.constant 0 : index
      %23 = vector.load %arg7[%c0_20, %c0_21] : memref<16x128xf32, #tpu.memory_space<vmem>>, vector<16x128xf32>
      tpu.vector_store %arg7[%c0_20, %c0_21], %22 {strides = array<i32>} : memref<16x128xf32, #tpu.memory_space<vmem>>, vector<16x128xf32>,
    } else {
    }
    return
  }
  func.func @transform_0(%arg0: i32, %arg1: i32) -> (i32, i32) {
    %c0_i32 = arith.constant 0 : i32
    %c0_i32_0 = arith.constant 0 : i32
    return %arg0, %c0_i32 : i32, i32
  }
  func.func @transform_1(%arg0: i32, %arg1: i32) -> (i32, i32) {
    %c0_i32 = arith.constant 0 : i32
    %c0_i32_0 = arith.constant 0 : i32
    return %c0_i32, %arg1 : i32, i32
  }
  func.func @transform_2(%arg0: i32, %arg1: i32) -> (i32, i32) {
    %c0_i32 = arith.constant 0 : i32
    %c0_i32_0 = arith.constant 0 : i32
    return %c0_i32, %arg1 : i32, i32
  }
  func.func @transform_3(%arg0: i32, %arg1: i32) -> (i32, i32) {
    %c0_i32 = arith.constant 0 : i32
    %c0_i32_0 = arith.constant 0 : i32
    return %arg1, %c0_i32 : i32, i32
  }
  func.func @transform_4(%arg0: i32, %arg1: i32) -> (i32, i32) {
    %c0_i32 = arith.constant 0 : i32
    %c0_i32_0 = arith.constant 0 : i32
    %c0_i32_1 = arith.constant 0 : i32
    return %c0_i32, %c0_i32_0 : i32, i32
  }
  func.func @transform_5(%arg0: i32, %arg1: i32) -> (i32, i32) {
    %c0_i32 = arith.constant 0 : i32
    %c0_i32_0 = arith.constant 0 : i32
    return %arg0, %c0_i32 : i32, i32
  }
}

</mosaic_0001>

<llo_original>
// kernel: tpu_custom_call.1
$region0: #{tpu_custom_call.1}
  #allocation0 [shape = 'u32[]', space=smem, size = 0x4, offset = 0x4, fixed_abs, tag = 'smem constant byte address 0x4 - core index']
  #allocation1 [shape = 'u32[72,128]{1,0:T(1,128)}', space=vmem, size = 0x9000, scoped, tag = 'internal scratch']
  #allocation2 [shape = 'f32[16,128]{1,0:T(8,128)}', space=vmem, size = 0x2000, scoped, tag = 'scratch operand']
  %s0 = inlined_call_operand.hbm [shape: f32[16,128], index: 0, kind: input, shape index: {}]
  %s1 = inlined_call_operand.hbm [shape: f32[128,256], index: 1, kind: input, shape index: {}]
  %s2 = inlined_call_operand.hbm [shape: f32[1,256], index: 2, kind: input, shape index: {}]
  %s3 = inlined_call_operand.hbm [shape: f32[256,128], index: 3, kind: input, shape index: {}]
  %s4 = inlined_call_operand.vmem [shape: f32[1,128], index: 4, kind: input, shape index: {}]
  %s5 = inlined_call_operand.hbm [shape: f32[16,128], index: 5, kind: output, shape index: {}]
  %s6 = sld [smem:[#allocation0]]
  $region54: #{tpu_custom_call.1} parent=0
    _
  %s8 = ssub.s32 1, %s6
  %s9 = scalar_select 0, %s8, %s6
  $region1: #{tpu_custom_call.1} parent=0
    #allocation3 [shape = 'u8[8192]{0}', space=vmem, size = 0x2000, scoped, tag = 'input window, operand 0, single buffered']
    #allocation4 [shape = 's32[1]{0}', space=sflag, size = 0x4, scoped, tag = 'scoped memory for tpu_custom_call.1']
    #allocation5 [shape = 's32[1]{0}', space=sflag, size = 0x4, scoped, tag = 'scoped memory for tpu_custom_call.1']
    #allocation6 [shape = 'u8[131072]{0}', space=vmem, size = 0x20000, scoped, tag = 'input window, operand 1, single buffered']
    #allocation7 [shape = 's32[1]{0}', space=sflag, size = 0x4, scoped, tag = 'scoped memory for tpu_custom_call.1']
    #allocation8 [shape = 'u8[1024]{0}', space=vmem, size = 0x400, scoped, tag = 'input window, operand 2, single buffered']
    #allocation9 [shape = 'u8[131072]{0}', space=vmem, size = 0x20000, scoped, tag = 'input window, operand 3, single buffered']
    #allocation10 [shape = 's32[1]{0}', space=sflag, size = 0x4, scoped, tag = 'scoped memory for tpu_custom_call.1']
    #allocation11 [shape = 'u8[8192]{0}', space=vmem, size = 0x2000, scoped, tag = 'output window, operand 0, single buffered']
    %10 = vsyncpa [#allocation4], 0
    %11 = vsyncpa [#allocation7], 0
    %12 = vsyncpa [#allocation10], 0
    %13 = vsyncpa [#allocation5], 0
    // Predicated region
    $region2: #{tpu_custom_call.1} parent=1 // pred_check
      _
    $region3: #{tpu_custom_call.1} parent=1 // pred_check_branch
      %15 = sbr.rel (0) target = $region5
    $region4: #{tpu_custom_call.1} parent=1 // pred_region
      %17 = vsyncadd [#allocation4], 0
      %s18 = sshll.u32 %s0, 4
      %s19 = int_to_ptr.hbm [resolvable:$true] %s18
      %s20 = sshll.u32 [#allocation3], 4
      %s21 = int_to_ptr.vmem [resolvable:$true] %s20
      %26 = dma.hbm_to_vmem [thread:$0]  %s19, 256, %s21, [#allocation4], 128, 128, 8
    $region5: #{tpu_custom_call.1} parent=1 // pred_fallthru
      _
    // Predicated region
    $region6: #{tpu_custom_call.1} parent=1 // pred_check
      _
    $region7: #{tpu_custom_call.1} parent=1 // pred_check_branch
      %28 = sbr.rel (0) target = $region9
    $region8: #{tpu_custom_call.1} parent=1 // pred_region
      %30 = vsyncadd [#allocation7], 0
      %s31 = sshll.u32 %s1, 4
      %s32 = int_to_ptr.hbm [resolvable:$true] %s31
      %s33 = sshll.u32 [#allocation6], 4
      %s34 = int_to_ptr.vmem [resolvable:$true] %s33
      %39 = dma.hbm_to_vmem [thread:$0]  %s32, 4096, %s34, [#allocation7], 256, 256, 16
    $region9: #{tpu_custom_call.1} parent=1 // pred_fallthru
      _
    // Predicated region
    $region10: #{tpu_custom_call.1} parent=1 // pred_check
      _
    $region11: #{tpu_custom_call.1} parent=1 // pred_check_branch
      %41 = sbr.rel (0) target = $region13
    $region12: #{tpu_custom_call.1} parent=1 // pred_region
      %43 = vsyncadd [#allocation7], 0
      %s45 = sshll.u32 %s2, 4
      %s46 = int_to_ptr.hbm [resolvable:$true] %s45
      %s47 = sshll.u32 [#allocation8], 4
      %s48 = int_to_ptr.vmem [resolvable:$true] %s47
      %50 = dma.hbm_to_vmem [thread:$0]  %s46, 32, %s48, [#allocation7]
    $region13: #{tpu_custom_call.1} parent=1 // pred_fallthru
      _
    // Predicated region
    $region14: #{tpu_custom_call.1} parent=1 // pred_check
      _
    $region15: #{tpu_custom_call.1} parent=1 // pred_check_branch
      %52 = sbr.rel (0) target = $region17
    $region16: #{tpu_custom_call.1} parent=1 // pred_region
      %54 = vsyncadd [#allocation10], 0
      %s55 = sshll.u32 %s3, 4
      %s56 = int_to_ptr.hbm [resolvable:$true] %s55
      %s57 = sshll.u32 [#allocation9], 4
      %s58 = int_to_ptr.vmem [resolvable:$true] %s57
      %63 = dma.hbm_to_vmem [thread:$0]  %s56, 4096, %s58, [#allocation10], 128, 128, 8
    $region17: #{tpu_custom_call.1} parent=1 // pred_fallthru
      _
    // Predicated region
    $region18: #{tpu_custom_call.1} parent=1 // pred_check
      _
    $region19: #{tpu_custom_call.1} parent=1 // pred_check_branch
      %65 = sbr.rel (0) target = $region21
    $region20: #{tpu_custom_call.1} parent=1 // pred_region
      _
    $region21: #{tpu_custom_call.1} parent=1 // pred_fallthru
      _
    // Predicated region
    $region22: #{tpu_custom_call.1} parent=1 // pred_check
      _
    $region23: #{tpu_custom_call.1} parent=1 // pred_check_branch
      %67 = sbr.rel (0) target = $region25
    $region24: #{tpu_custom_call.1} parent=1 // pred_region
      %69 = dma.done [#allocation4], 256
    $region25: #{tpu_custom_call.1} parent=1 // pred_fallthru
      _
    // Predicated region
    $region26: #{tpu_custom_call.1} parent=1 // pred_check
      _
    $region27: #{tpu_custom_call.1} parent=1 // pred_check_branch
      %71 = sbr.rel (0) target = $region29
    $region28: #{tpu_custom_call.1} parent=1 // pred_region
      %73 = dma.done [#allocation7], 4096
    $region29: #{tpu_custom_call.1} parent=1 // pred_fallthru
      _
    // Predicated region
    $region30: #{tpu_custom_call.1} parent=1 // pred_check
      _
    $region31: #{tpu_custom_call.1} parent=1 // pred_check_branch
      %75 = sbr.rel (0) target = $region33
    $region32: #{tpu_custom_call.1} parent=1 // pred_region
      %77 = dma.done [#allocation7], 32
    $region33: #{tpu_custom_call.1} parent=1 // pred_fallthru
      _
    // Predicated region
    $region34: #{tpu_custom_call.1} parent=1 // pred_check
      _
    $region35: #{tpu_custom_call.1} parent=1 // pred_check_branch
      %79 = sbr.rel (0) target = $region37
    $region36: #{tpu_custom_call.1} parent=1 // pred_region
      %81 = dma.done [#allocation10], 4096
    $region37: #{tpu_custom_call.1} parent=1 // pred_fallthru
      _
    %p82 = scmp.eq.s32.totalorder 0, 0
    // Predicated region
    $region38: #{tpu_custom_call.1} parent=1 // pred_check
      %p83 = pneg %p82
    $region39: #{tpu_custom_call.1} parent=1 // pred_check_branch
      %85 = sbr.rel (%p83) target = $region41
    $region40: #{tpu_custom_call.1} parent=1 // pred_region
      %86 = vst [vmem:[#allocation2] sm:$0xff] 0.0
      %87 = vst [vmem:[#allocation2 + $0x8] sm:$0xff] 0.0
    $region41: #{tpu_custom_call.1} parent=1 // pred_fallthru
      _
    %v88 = vld [vmem:[#allocation3] sm:$0xff]
    %v89 = vld [vmem:[#allocation3 + $0x8] sm:$0xff]
    %v90 = vld [vmem:[#allocation6] sm:$0xff]
    %v91 = vld [vmem:[#allocation6 + $0x8] sm:$0xff]
    %v92 = vld [vmem:[#allocation6 + $0x10] sm:$0xff]
    %v93 = vld [vmem:[#allocation6 + $0x18] sm:$0xff]
    %v94 = vld [vmem:[#allocation6 + $0x20] sm:$0xff]
    %v95 = vld [vmem:[#allocation6 + $0x28] sm:$0xff]
    %v96 = vld [vmem:[#allocation6 + $0x30] sm:$0xff]
    %v97 = vld [vmem:[#allocation6 + $0x38] sm:$0xff]
    %v98 = vld [vmem:[#allocation6 + $0x40] sm:$0xff]
    %v99 = vld [vmem:[#allocation6 + $0x48] sm:$0xff]
    %v100 = vld [vmem:[#allocation6 + $0x50] sm:$0xff]
    %v101 = vld [vmem:[#allocation6 + $0x58] sm:$0xff]
    %v102 = vld [vmem:[#allocation6 + $0x60] sm:$0xff]
    %v103 = vld [vmem:[#allocation6 + $0x68] sm:$0xff]
    %v104 = vld [vmem:[#allocation6 + $0x70] sm:$0xff]
    %v105 = vld [vmem:[#allocation6 + $0x78] sm:$0xff]
    %v106 = vld [vmem:[#allocation6 + $0x80] sm:$0xff]
    %v107 = vld [vmem:[#allocation6 + $0x88] sm:$0xff]
    %v108 = vld [vmem:[#allocation6 + $0x90] sm:$0xff]
    %v109 = vld [vmem:[#allocation6 + $0x98] sm:$0xff]
    %v110 = vld [vmem:[#allocation6 + $0xa0] sm:$0xff]
    %v111 = vld [vmem:[#allocation6 + $0xa8] sm:$0xff]
    %v112 = vld [vmem:[#allocation6 + $0xb0] sm:$0xff]
    %v113 = vld [vmem:[#allocation6 + $0xb8] sm:$0xff]
    %v114 = vld [vmem:[#allocation6 + $0xc0] sm:$0xff]
    %v115 = vld [vmem:[#allocation6 + $0xc8] sm:$0xff]
    %v116 = vld [vmem:[#allocation6 + $0xd0] sm:$0xff]
    %v117 = vld [vmem:[#allocation6 + $0xd8] sm:$0xff]
    %v118 = vld [vmem:[#allocation6 + $0xe0] sm:$0xff]
    %v119 = vld [vmem:[#allocation6 + $0xe8] sm:$0xff]
    %v120 = vld [vmem:[#allocation6 + $0xf0] sm:$0xff]
    %v121 = vld [vmem:[#allocation6 + $0xf8] sm:$0xff]
    %v122 = vld [vmem:[#allocation8] sm:$0x3]
    %v124 = vperm.slane %v122, 0
    %v125 = vperm.slane %v122, 1
    %128 = vmatpush.msra.mxu0 %v120
    %129 = vmatpush.msra.mxu0 %v118
    %130 = vmatpush.msra.mxu0 %v116
    %131 = vmatpush.msra.mxu0 %v114
    %132 = vmatpush.msra.mxu0 %v112
    %133 = vmatpush.msra.mxu0 %v110
    %134 = vmatpush.msra.mxu0 %v108
    %135 = vmatpush.msra.mxu0 %v106
    %136 = vmatpush.msra.mxu0 %v104
    %137 = vmatpush.msra.mxu0 %v102
    %138 = vmatpush.msra.mxu0 %v100
    %139 = vmatpush.msra.mxu0 %v98
    %140 = vmatpush.msra.mxu0 %v96
    %141 = vmatpush.msra.mxu0 %v94
    %142 = vmatpush.msra.mxu0 %v92
    %143 = vmatpush.msra.mxu0 %v90
    %144 = vmatmul.f32.gmra.mxu0 %v88
    %v145 = vpop.f32.mrf.mxu0
    %v146 = vadd.f32 %v124, %v145
    %147 = vmatmul.f32.gmra.mxu0 %v89
    %v148 = vpop.f32.mrf.mxu0
    %v149 = vadd.f32 %v124, %v148
    %150 = vdwg.mxu0
    %151 = vmatpush.msra.mxu0 %v121
    %152 = vmatpush.msra.mxu0 %v119
    %153 = vmatpush.msra.mxu0 %v117
    %154 = vmatpush.msra.mxu0 %v115
    %155 = vmatpush.msra.mxu0 %v113
    %156 = vmatpush.msra.mxu0 %v111
    %157 = vmatpush.msra.mxu0 %v109
    %158 = vmatpush.msra.mxu0 %v107
    %159 = vmatpush.msra.mxu0 %v105
    %160 = vmatpush.msra.mxu0 %v103
    %161 = vmatpush.msra.mxu0 %v101
    %162 = vmatpush.msra.mxu0 %v99
    %163 = vmatpush.msra.mxu0 %v97
    %164 = vmatpush.msra.mxu0 %v95
    %165 = vmatpush.msra.mxu0 %v93
    %166 = vmatpush.msra.mxu0 %v91
    %167 = vmatmul.f32.gmra.mxu0 %v88
    %v168 = vpop.f32.mrf.mxu0
    %v169 = vadd.f32 %v125, %v168
    %170 = vmatmul.f32.gmra.mxu0 %v89
    %v171 = vpop.f32.mrf.mxu0
    %v172 = vadd.f32 %v125, %v171
    %173 = vdwg.mxu0
    %v174 = vmax.f32 %v146, 0.0
    %v175 = vmax.f32 %v169, 0.0
    %v176 = vmax.f32 %v149, 0.0
    %v177 = vmax.f32 %v172, 0.0
    %v178 = vld [vmem:[#allocation2] sm:$0xff]
    %v179 = vld [vmem:[#allocation2 + $0x8] sm:$0xff]
    %v180 = vld [vmem:[#allocation9] sm:$0xff]
    %v181 = vld [vmem:[#allocation9 + $0x8] sm:$0xff]
    %v182 = vld [vmem:[#allocation9 + $0x10] sm:$0xff]
    %v183 = vld [vmem:[#allocation9 + $0x18] sm:$0xff]
    %v184 = vld [vmem:[#allocation9 + $0x20] sm:$0xff]
    %v185 = vld [vmem:[#allocation9 + $0x28] sm:$0xff]
    %v186 = vld [vmem:[#allocation9 + $0x30] sm:$0xff]
    %v187 = vld [vmem:[#allocation9 + $0x38] sm:$0xff]
    %v188 = vld [vmem:[#allocation9 + $0x40] sm:$0xff]
    %v189 = vld [vmem:[#allocation9 + $0x48] sm:$0xff]
    %v190 = vld [vmem:[#allocation9 + $0x50] sm:$0xff]
    %v191 = vld [vmem:[#allocation9 + $0x58] sm:$0xff]
    %v192 = vld [vmem:[#allocation9 + $0x60] sm:$0xff]
    %v193 = vld [vmem:[#allocation9 + $0x68] sm:$0xff]
    %v194 = vld [vmem:[#allocation9 + $0x70] sm:$0xff]
    %v195 = vld [vmem:[#allocation9 + $0x78] sm:$0xff]
    %v196 = vld [vmem:[#allocation9 + $0x80] sm:$0xff]
    %v197 = vld [vmem:[#allocation9 + $0x88] sm:$0xff]
    %v198 = vld [vmem:[#allocation9 + $0x90] sm:$0xff]
    %v199 = vld [vmem:[#allocation9 + $0x98] sm:$0xff]
    %v200 = vld [vmem:[#allocation9 + $0xa0] sm:$0xff]
    %v201 = vld [vmem:[#allocation9 + $0xa8] sm:$0xff]
    %v202 = vld [vmem:[#allocation9 + $0xb0] sm:$0xff]
    %v203 = vld [vmem:[#allocation9 + $0xb8] sm:$0xff]
    %v204 = vld [vmem:[#allocation9 + $0xc0] sm:$0xff]
    %v205 = vld [vmem:[#allocation9 + $0xc8] sm:$0xff]
    %v206 = vld [vmem:[#allocation9 + $0xd0] sm:$0xff]
    %v207 = vld [vmem:[#allocation9 + $0xd8] sm:$0xff]
    %v208 = vld [vmem:[#allocation9 + $0xe0] sm:$0xff]
    %v209 = vld [vmem:[#allocation9 + $0xe8] sm:$0xff]
    %v210 = vld [vmem:[#allocation9 + $0xf0] sm:$0xff]
    %v211 = vld [vmem:[#allocation9 + $0xf8] sm:$0xff]
    %212 = vmatpush.msra.mxu0 %v195
    %213 = vmatpush.msra.mxu0 %v194
    %214 = vmatpush.msra.mxu0 %v193
    %215 = vmatpush.msra.mxu0 %v192
    %216 = vmatpush.msra.mxu0 %v191
    %217 = vmatpush.msra.mxu0 %v190
    %218 = vmatpush.msra.mxu0 %v189
    %219 = vmatpush.msra.mxu0 %v188
    %220 = vmatpush.msra.mxu0 %v187
    %221 = vmatpush.msra.mxu0 %v186
    %222 = vmatpush.msra.mxu0 %v185
    %223 = vmatpush.msra.mxu0 %v184
    %224 = vmatpush.msra.mxu0 %v183
    %225 = vmatpush.msra.mxu0 %v182
    %226 = vmatpush.msra.mxu0 %v181
    %227 = vmatpush.msra.mxu0 %v180
    %228 = vmatmul.f32.gmra.mxu0 %v174
    %v229 = vpop.f32.mrf.mxu0
    %v230 = vadd.f32 0.0, %v229
    %231 = vmatmul.f32.gmra.mxu0 %v176
    %v232 = vpop.f32.mrf.mxu0
    %v233 = vadd.f32 0.0, %v232
    %234 = vdwg.mxu0
    %235 = vmatpush.msra.mxu0 %v211
    %236 = vmatpush.msra.mxu0 %v210
    %237 = vmatpush.msra.mxu0 %v209
    %238 = vmatpush.msra.mxu0 %v208
    %239 = vmatpush.msra.mxu0 %v207
    %240 = vmatpush.msra.mxu0 %v206
    %241 = vmatpush.msra.mxu0 %v205
    %242 = vmatpush.msra.mxu0 %v204
    %243 = vmatpush.msra.mxu0 %v203
    %244 = vmatpush.msra.mxu0 %v202
    %245 = vmatpush.msra.mxu0 %v201
    %246 = vmatpush.msra.mxu0 %v200
    %247 = vmatpush.msra.mxu0 %v199
    %248 = vmatpush.msra.mxu0 %v198
    %249 = vmatpush.msra.mxu0 %v197
    %250 = vmatpush.msra.mxu0 %v196
    %251 = vmatmul.f32.gmra.mxu0 %v175
    %v252 = vpop.f32.mrf.mxu0
    %v253 = vadd.f32 %v230, %v252
    %254 = vmatmul.f32.gmra.mxu0 %v177
    %v255 = vpop.f32.mrf.mxu0
    %v256 = vadd.f32 %v233, %v255
    %257 = vdwg.mxu0
    %v258 = vadd.f32 %v178, %v253
    %v259 = vadd.f32 %v179, %v256
    %260 = vst [vmem:[#allocation2] sm:$0xff] %v258
    %261 = vst [vmem:[#allocation2 + $0x8] sm:$0xff] %v259
    // Predicated region
    $region42: #{tpu_custom_call.1} parent=1 // pred_check
      %p262 = pneg %p82
    $region43: #{tpu_custom_call.1} parent=1 // pred_check_branch
      %264 = sbr.rel (%p262) target = $region45
    $region44: #{tpu_custom_call.1} parent=1 // pred_region
      %v265 = vld [vmem:[#allocation2] sm:$0xff]
      %v266 = vld [vmem:[#allocation2 + $0x8] sm:$0xff]
      %v267 = vld [vmem:[%s4] sm:$0x1]
      %v269 = vperm.slane %v267, 0
      %v271 = vadd.f32 %v265, %v269
      %v272 = vadd.f32 %v266, %v269
      %273 = vst [vmem:[#allocation11] sm:$0xff] %v271
      %274 = vst [vmem:[#allocation11 + $0x8] sm:$0xff] %v272
    $region45: #{tpu_custom_call.1} parent=1 // pred_fallthru
      _
    // Predicated region
    $region46: #{tpu_custom_call.1} parent=1 // pred_check
      _
    $region47: #{tpu_custom_call.1} parent=1 // pred_check_branch
      %276 = sbr.rel (0) target = $region49
    $region48: #{tpu_custom_call.1} parent=1 // pred_region
      %278 = vsyncadd [#allocation5], 0
      %s279 = sshll.u32 [#allocation11], 4
      %s280 = int_to_ptr.vmem [resolvable:$true] %s279
      %s281 = sshll.u32 %s5, 4
      %s282 = int_to_ptr.hbm [resolvable:$true] %s281
      %287 = dma.vmem_to_hbm [thread:$0]  %s280, 256, %s282, [#allocation5], 128, 128, 8
    $region49: #{tpu_custom_call.1} parent=1 // pred_fallthru
      _
    // Predicated region
    $region50: #{tpu_custom_call.1} parent=1 // pred_check
      _
    $region51: #{tpu_custom_call.1} parent=1 // pred_check_branch
      %289 = sbr.rel (0) target = $region53
    $region52: #{tpu_custom_call.1} parent=1 // pred_region
      %291 = dma.done [#allocation5], 256
    $region53: #{tpu_custom_call.1} parent=1 // pred_fallthru
      _
    %292 = vsyncpa [#allocation4], 1
    %293 = vsyncpa [#allocation7], 1
    %294 = vsyncpa [#allocation10], 1
    %295 = vsyncpa [#allocation5], 1

</llo_original>
